<compile_context>
chip_gen: v7x
topology: tpu7x:2x2x1
jax: 0.10.0
libtpu: 0.0.40
codegen_flags: <defaults>
</compile_context>

<pallas_src>
import functools

import jax
import jax.numpy as jnp
from jax.experimental import pallas as pl
from jax.experimental.pallas import tpu as pltpu

LANE = 128


# ----------------------------- Pallas kernel --------------------------------
def mlp_kernel(x_ref, w1_ref, b1_ref, w2_ref, b2_ref, w3_ref, b3_ref, o_ref):
    """Fused 3-layer MLP on one batch tile.

    Operands are bf16 (MXU-native), accumulation + bias-add + ReLU in f32.
    Contraction dims are left at their true (unpadded) widths; only the output
    lane dim is padded to 128 so the final store is lane-dense.
    """
    h = jnp.dot(x_ref[...], w1_ref[...], preferred_element_type=jnp.float32)
    h = jnp.maximum(h + b1_ref[...], 0.0)
    h = jnp.dot(h.astype(jnp.bfloat16), w2_ref[...],
                preferred_element_type=jnp.float32)
    h = jnp.maximum(h + b2_ref[...], 0.0)
    o = jnp.dot(h.astype(jnp.bfloat16), w3_ref[...],
                preferred_element_type=jnp.float32)
    o_ref[...] = (o + b3_ref[...]).astype(o_ref.dtype)


# ------------------------------- helpers -------------------------------------
def _round_up(n, m):
    return ((n + m - 1) // m) * m


def _pad2d(a, rows, cols, dtype):
    out = jnp.zeros((rows, cols), dtype)
    return out.at[: a.shape[0], : a.shape[1]].set(a.astype(dtype))


def prepare_params(params):
    """One-time (hoisted) prep: cast weights/biases, pad ONLY the output lane dim."""
    (w1, b1), (w2, b2), (w3, b3) = params
    out_dim = w3.shape[1]
    out_p = _round_up(out_dim, LANE)
    w1p = w1.astype(jnp.bfloat16)                              # (in, h1)  unpadded
    w2p = w2.astype(jnp.bfloat16)                              # (h1, h2)  unpadded
    w3p = _pad2d(w3, w3.shape[0], out_p, jnp.bfloat16)         # (h2, out_p) lane-dense N
    b1p = b1.astype(jnp.float32)
    b2p = b2.astype(jnp.float32)
    b3p = _pad2d(b3, 1, out_p, jnp.float32)
    return (w1p, b1p, w2p, b2p, w3p, b3p)


# ------------------------------- forward -------------------------------------
@functools.partial(jax.jit, static_argnames=("out_dim", "tile_b", "core_parallel"))
def neural_module_forward(x, w1p, b1p, w2p, b2p, w3p, b3p, *,
                          out_dim, tile_b=None, core_parallel=False):
    """Fused MLP forward as one Pallas call with a batch grid.

    Weights/biases (<1 MiB total) stay VMEM-resident across all batch tiles;
    only x / out tiles are streamed. jit fuses the x cast/pad and output slice.
    """
    batch, in_dim = x.shape
    h1 = w1p.shape[1]
    h2 = w2p.shape[1]
    out_p = w3p.shape[1]

    if tile_b is None:
        # Scale the batch tile with the problem: big tiles amortize the ~0.35 us
        # per-grid-step overhead; cap at 512 rows (512x128 bf16 x2 buffers << VMEM).
        tile_b = min(512, _round_up(batch, 128))
    batch_p = _round_up(batch, tile_b)

    # Only batch padding + bf16 cast for x; no lane (K) padding.
    xp = x.astype(jnp.bfloat16)
    if batch_p != batch:
        xp = jnp.zeros((batch_p, in_dim), jnp.bfloat16).at[:batch].set(xp)

    grid = (batch_p // tile_b,)

    flops = 2 * batch_p * (in_dim * h1 + h1 * h2 + h2 * out_p)
    bytes_accessed = (
        batch_p * in_dim * 2                                   # x (bf16)
        + (in_dim * h1 + h1 * h2 + h2 * out_p) * 2             # weights (bf16), read once
        + (h1 + h2 + out_p) * 4                                # biases (f32)
        + batch_p * out_p * 4                                  # output (f32)
    )

    # Weights/biases: same block (0, 0) for every grid step -> VMEM-resident.
    resident = lambda shape: pl.BlockSpec(shape, lambda i: (0, 0))

    # CORE_PARALLEL shards the batch grid across v7x's two TensorCores;
    # plain "parallel" is the safe default on single-TC chips (v5e/v6e).
    semantics = (pltpu.CORE_PARALLEL,) if core_parallel else ("parallel",)

    out = pl.pallas_call(
        mlp_kernel,
        out_shape=jax.ShapeDtypeStruct((batch_p, out_p), jnp.float32),
        grid_spec=pltpu.PrefetchScalarGridSpec(
            num_scalar_prefetch=0,
            grid=grid,
            in_specs=[
                pl.BlockSpec((tile_b, in_dim), lambda i: (i, 0)),  # streamed x tile
                resident((in_dim, h1)), resident((1, h1)),
                resident((h1, h2)),     resident((1, h2)),
                resident((h2, out_p)),  resident((1, out_p)),
            ],
            out_specs=pl.BlockSpec((tile_b, out_p), lambda i: (i, 0)),
        ),
        compiler_params=pltpu.CompilerParams(dimension_semantics=semantics),
        cost_estimate=pl.CostEstimate(
            flops=flops, transcendentals=0, bytes_accessed=bytes_accessed),
    )(xp, w1p, b1p, w2p, b2p, w3p, b3p)

    return out[:batch, :out_dim]


# --------------------------- parameter construction -------------------------
def build_params(key, input_dim, hidden_dims, output_dim,
                 connection_density=0.2, plasticity=0.9):
    """Deterministic init mirroring ModuleConfig:
    - weights scaled by `plasticity` (initial learning-rate proxy)
    - a binary mask with `connection_density` fraction of active connections
    """
    dims = [input_dim] + list(hidden_dims) + [output_dim]
    params = []
    for i in range(len(dims) - 1):
        key, kw, km = jax.random.split(key, 3)
        fan_in, fan_out = dims[i], dims[i + 1]
        w = jax.random.normal(kw, (fan_in, fan_out), jnp.float32)
        w = w * (plasticity / jnp.sqrt(fan_in))
        mask = (jax.random.uniform(km, (fan_in, fan_out)) < connection_density)
        w = w * mask.astype(jnp.float32)
        b = jnp.zeros((1, fan_out), jnp.float32)
        params.append((w, b))
    return params


# ---------------------------------- main -------------------------------------
if __name__ == "__main__":
    # Shapes consistent with ModuleConfig(input_dim, hidden_dims, output_dim).
    batch = 256
    input_dim = 32
    hidden_dims = [64, 64]
    output_dim = 16

    key = jax.random.PRNGKey(0)
    key, kx = jax.random.split(key)
    x = jax.random.normal(kx, (batch, input_dim), jnp.float32)

    params = build_params(key, input_dim, hidden_dims, output_dim,
                          connection_density=0.2, plasticity=0.9)

    # Hoisted one-time prep (padding + casts happen here, not per forward call).
    padded = prepare_params(params)

    out = neural_module_forward(x, *padded, out_dim=output_dim)
    jax.block_until_ready(out)

    # Pure-JAX reference mirroring the kernel's bf16-operand / f32-accumulate math.
    (w1, b1), (w2, b2), (w3, b3) = params
    bf = jnp.bfloat16
    f32 = jnp.float32
    ref = jnp.maximum(
        jnp.dot(x.astype(bf), w1.astype(bf), preferred_element_type=f32) + b1, 0.0)
    ref = jnp.maximum(
        jnp.dot(ref.astype(bf), w2.astype(bf), preferred_element_type=f32) + b2, 0.0)
    ref = jnp.dot(ref.astype(bf), w3.astype(bf), preferred_element_type=f32) + b3

    assert out.shape == (batch, output_dim)
    assert jnp.allclose(out, ref, atol=1e-2, rtol=1e-2), \
        f"max abs err = {jnp.max(jnp.abs(out - ref))}"

    # TODO(synk): NeuralModule.forward/_adapt_to_developmental_stage/save/load are abstract
    # or host-side state management; this implements the MLP forward its ModuleConfig
    # (dims, plasticity, connection density) implies.
    print("KERNEL_OK")
</pallas_src>

<mosaic_0001>
module attributes {stable_mosaic.version = 11 : i64} {
  func.func @mlp_kernel(%arg0: i32, %arg1: memref<256x32xbf16, #tpu.memory_space<vmem>>, %arg2: memref<32x64xbf16, #tpu.memory_space<vmem>>, %arg3: memref<1x64xf32, #tpu.memory_space<vmem>>, %arg4: memref<64x64xbf16, #tpu.memory_space<vmem>>, %arg5: memref<1x64xf32, #tpu.memory_space<vmem>>, %arg6: memref<64x128xbf16, #tpu.memory_space<vmem>>, %arg7: memref<1x128xf32, #tpu.memory_space<vmem>>, %arg8: memref<256x128xf32, #tpu.memory_space<vmem>>) attributes {dimension_semantics = [#tpu.dimension_semantics<parallel>], iteration_bounds = array<i64: 1>, scalar_prefetch = 0 : i64, scratch_operands = 0 : i64, tpu.core_type = #tpu.core_type<tc>, window_params = [{transform_indices = @transform_0, window_bounds = array<i64: 256, 32>}, {pipeline_mode = #tpu.pipeline_mode<synchronous>, transform_indices = @transform_1, window_bounds = array<i64: 32, 64>}, {pipeline_mode = #tpu.pipeline_mode<synchronous>, transform_indices = @transform_2, window_bounds = array<i64: 1, 64>}, {pipeline_mode = #tpu.pipeline_mode<synchronous>, transform_indices = @transform_3, window_bounds = array<i64: 64, 64>}, {pipeline_mode = #tpu.pipeline_mode<synchronous>, transform_indices = @transform_4, window_bounds = array<i64: 1, 64>}, {pipeline_mode = #tpu.pipeline_mode<synchronous>, transform_indices = @transform_5, window_bounds = array<i64: 64, 128>}, {pipeline_mode = #tpu.pipeline_mode<synchronous>, transform_indices = @transform_6, window_bounds = array<i64: 1, 128>}, {transform_indices = @transform_7, window_bounds = array<i64: 256, 128>}]} {
    %c0 = arith.constant 0 : index
    %c0_0 = arith.constant 0 : index
    %0 = vector.load %arg1[%c0, %c0_0] : memref<256x32xbf16, #tpu.memory_space<vmem>>, vector<256x32xbf16>
    %c0_1 = arith.constant 0 : index
    %c0_2 = arith.constant 0 : index
    %1 = vector.load %arg2[%c0_1, %c0_2] : memref<32x64xbf16, #tpu.memory_space<vmem>>, vector<32x64xbf16>
    %cst = arith.constant dense<0.000000e+00> : vector<256x64xf32>
    %2 = tpu.matmul %0, %1, %cst {dimension_numbers = #tpu.dot_dimension_numbers<[1], [0], [0], [1], [0, 0, 1, 1], [], []>} : vector<256x32xbf16>, vector<32x64xbf16>, vector<256x64xf32> -> vector<256x64xf32>
    %c0_3 = arith.constant 0 : index
    %c0_4 = arith.constant 0 : index
    %3 = vector.load %arg3[%c0_3, %c0_4] : memref<1x64xf32, #tpu.memory_space<vmem>>, vector<1x64xf32>
    %4 = vector.broadcast %3 : vector<1x64xf32> to vector<256x64xf32>
    %5 = arith.addf %2, %4 : vector<256x64xf32>
    %cst_5 = arith.constant 0.000000e+00 : f32
    %6 = vector.broadcast %cst_5 : f32 to vector<256x64xf32>
    %7 = arith.maximumf %5, %6 : vector<256x64xf32>
    %8 = arith.truncf %7 : vector<256x64xf32> to vector<256x64xbf16>
    %c0_6 = arith.constant 0 : index
    %c0_7 = arith.constant 0 : index
    %9 = vector.load %arg4[%c0_6, %c0_7] : memref<64x64xbf16, #tpu.memory_space<vmem>>, vector<64x64xbf16>
    %cst_8 = arith.constant dense<0.000000e+00> : vector<256x64xf32>
    %10 = tpu.matmul %8, %9, %cst_8 {dimension_numbers = #tpu.dot_dimension_numbers<[1], [0], [0], [1], [0, 0, 1, 1], [], []>} : vector<256x64xbf16>, vector<64x64xbf16>, vector<256x64xf32> -> vector<256x64xf32>
    %c0_9 = arith.constant 0 : index
    %c0_10 = arith.constant 0 : index
    %11 = vector.load %arg5[%c0_9, %c0_10] : memref<1x64xf32, #tpu.memory_space<vmem>>, vector<1x64xf32>
    %12 = vector.broadcast %11 : vector<1x64xf32> to vector<256x64xf32>
    %13 = arith.addf %10, %12 : vector<256x64xf32>
    %cst_11 = arith.constant 0.000000e+00 : f32
    %14 = vector.broadcast %cst_11 : f32 to vector<256x64xf32>
    %15 = arith.maximumf %13, %14 : vector<256x64xf32>
    %16 = arith.truncf %15 : vector<256x64xf32> to vector<256x64xbf16>
    %c0_12 = arith.constant 0 : index
    %c0_13 = arith.constant 0 : index
    %17 = vector.load %arg6[%c0_12, %c0_13] : memref<64x128xbf16, #tpu.memory_space<vmem>>, vector<64x128xbf16>
    %cst_14 = arith.constant dense<0.000000e+00> : vector<256x128xf32>
    %18 = tpu.matmul %16, %17, %cst_14 {dimension_numbers = #tpu.dot_dimension_numbers<[1], [0], [0], [1], [0, 0, 1, 1], [], []>} : vector<256x64xbf16>, vector<64x128xbf16>, vector<256x128xf32> -> vector<256x128xf32>
    %c0_15 = arith.constant 0 : index
    %c0_16 = arith.constant 0 : index
    %19 = vector.load %arg7[%c0_15, %c0_16] : memref<1x128xf32, #tpu.memory_space<vmem>>, vector<1x128xf32>
    %20 = vector.broadcast %19 : vector<1x128xf32> to vector<256x128xf32>
    %21 = arith.addf %18, %20 : vector<256x128xf32>
    %c0_17 = arith.constant 0 : index
    %c0_18 = arith.constant 0 : index
    %22 = vector.load %arg8[%c0_17, %c0_18] : memref<256x128xf32, #tpu.memory_space<vmem>>, vector<256x128xf32>
    tpu.vector_store %arg8[%c0_17, %c0_18], %21 {strides = array<i32>} : memref<256x128xf32, #tpu.memory_space<vmem>>, vector<256x128xf32>,
    return
  }
  func.func @transform_0(%arg0: i32) -> (i32, i32) {
    %c0_i32 = arith.constant 0 : i32
    %c0_i32_0 = arith.constant 0 : i32
    return %arg0, %c0_i32 : i32, i32
  }
  func.func @transform_1(%arg0: i32) -> (i32, i32) {
    %c0_i32 = arith.constant 0 : i32
    %c0_i32_0 = arith.constant 0 : i32
    %c0_i32_1 = arith.constant 0 : i32
    return %c0_i32, %c0_i32_0 : i32, i32
  }
  func.func @transform_2(%arg0: i32) -> (i32, i32) {
    %c0_i32 = arith.constant 0 : i32
    %c0_i32_0 = arith.constant 0 : i32
    %c0_i32_1 = arith.constant 0 : i32
    return %c0_i32, %c0_i32_0 : i32, i32
  }
  func.func @transform_3(%arg0: i32) -> (i32, i32) {
    %c0_i32 = arith.constant 0 : i32
    %c0_i32_0 = arith.constant 0 : i32
    %c0_i32_1 = arith.constant 0 : i32
    return %c0_i32, %c0_i32_0 : i32, i32
  }
  func.func @transform_4(%arg0: i32) -> (i32, i32) {
    %c0_i32 = arith.constant 0 : i32
    %c0_i32_0 = arith.constant 0 : i32
    %c0_i32_1 = arith.constant 0 : i32
    return %c0_i32, %c0_i32_0 : i32, i32
  }
  func.func @transform_5(%arg0: i32) -> (i32, i32) {
    %c0_i32 = arith.constant 0 : i32
    %c0_i32_0 = arith.constant 0 : i32
    %c0_i32_1 = arith.constant 0 : i32
    return %c0_i32, %c0_i32_0 : i32, i32
  }
  func.func @transform_6(%arg0: i32) -> (i32, i32) {
    %c0_i32 = arith.constant 0 : i32
    %c0_i32_0 = arith.constant 0 : i32
    %c0_i32_1 = arith.constant 0 : i32
    return %c0_i32, %c0_i32_0 : i32, i32
  }
  func.func @transform_7(%arg0: i32) -> (i32, i32) {
    %c0_i32 = arith.constant 0 : i32
    %c0_i32_0 = arith.constant 0 : i32
    return %arg0, %c0_i32 : i32, i32
  }
}

</mosaic_0001>

<llo_original>
// kernel: neural_module_forward.1
$region0: #{neural_module_forward.1}
  #allocation0 [shape = 'u32[]', space=smem, size = 0x4, offset = 0x4, fixed_abs, tag = 'smem constant byte address 0x4 - core index']
  #allocation1 [shape = 'u32[144,128]{1,0:T(1,128)}', space=vmem, size = 0x12000, scoped, tag = 'internal scratch']
  %s0 = inlined_call_operand.vmem [shape: bf16[256,32], index: 0, kind: input, shape index: {}]
  %s1 = inlined_call_operand.vmem [shape: bf16[32,64], index: 1, kind: input, shape index: {}]
  %s2 = inlined_call_operand.vmem [shape: f32[1,64], index: 2, kind: input, shape index: {}]
  %s3 = inlined_call_operand.vmem [shape: bf16[64,64], index: 3, kind: input, shape index: {}]
  %s4 = inlined_call_operand.vmem [shape: f32[1,64], index: 4, kind: input, shape index: {}]
  %s5 = inlined_call_operand.vmem [shape: bf16[64,128], index: 5, kind: input, shape index: {}]
  %s6 = inlined_call_operand.vmem [shape: f32[1,128], index: 6, kind: input, shape index: {}]
  %s7 = inlined_call_operand.vmem [shape: f32[256,128], index: 7, kind: output, shape index: {}]
  %s8 = sld [smem:[#allocation0]]
  $region38: #{neural_module_forward.1} parent=0
    _
  %s10 = ssub.s32 1, %s8
  %s11 = scalar_select 0, %s10, %s8
  // Predicated region
  $region2: #{neural_module_forward.1} parent=0 // pred_check
    _
  $region3: #{neural_module_forward.1} parent=0 // pred_check_branch
    %13 = sbr.rel (0) target = $region5
  $region4: #{neural_module_forward.1} parent=0 // pred_region
    _
  $region5: #{neural_module_forward.1} parent=0 // pred_fallthru
    _
  // Predicated region
  $region6: #{neural_module_forward.1} parent=0 // pred_check
    _
  $region7: #{neural_module_forward.1} parent=0 // pred_check_branch
    %15 = sbr.rel (0) target = $region9
  $region8: #{neural_module_forward.1} parent=0 // pred_region
    _
  $region9: #{neural_module_forward.1} parent=0 // pred_fallthru
    _
  // Predicated region
  $region10: #{neural_module_forward.1} parent=0 // pred_check
    _
  $region11: #{neural_module_forward.1} parent=0 // pred_check_branch
    %17 = sbr.rel (0) target = $region13
  $region12: #{neural_module_forward.1} parent=0 // pred_region
    _
  $region13: #{neural_module_forward.1} parent=0 // pred_fallthru
    _
  // Predicated region
  $region14: #{neural_module_forward.1} parent=0 // pred_check
    _
  $region15: #{neural_module_forward.1} parent=0 // pred_check_branch
    %19 = sbr.rel (0) target = $region17
  $region16: #{neural_module_forward.1} parent=0 // pred_region
    _
  $region17: #{neural_module_forward.1} parent=0 // pred_fallthru
    _
  // Predicated region
  $region18: #{neural_module_forward.1} parent=0 // pred_check
    _
  $region19: #{neural_module_forward.1} parent=0 // pred_check_branch
    %21 = sbr.rel (0) target = $region21
  $region20: #{neural_module_forward.1} parent=0 // pred_region
    _
  $region21: #{neural_module_forward.1} parent=0 // pred_fallthru
    _
  // Predicated region
  $region22: #{neural_module_forward.1} parent=0 // pred_check
    _
  $region23: #{neural_module_forward.1} parent=0 // pred_check_branch
    %23 = sbr.rel (0) target = $region25
  $region24: #{neural_module_forward.1} parent=0 // pred_region
    _
  $region25: #{neural_module_forward.1} parent=0 // pred_fallthru
    _
  // Predicated region
  $region26: #{neural_module_forward.1} parent=0 // pred_check
    _
  $region27: #{neural_module_forward.1} parent=0 // pred_check_branch
    %25 = sbr.rel (0) target = $region29
  $region28: #{neural_module_forward.1} parent=0 // pred_region
    _
  $region29: #{neural_module_forward.1} parent=0 // pred_fallthru
    _
  %v27 = vld [vmem:[%s0] sm:$0xf]
  %v28 = vld [vmem:[%s0 + $0x4] sm:$0xf]
  %v29 = vld [vmem:[%s0 + $0x8] sm:$0xf]
  %v30 = vld [vmem:[%s0 + $0xc] sm:$0xf]
  %v31 = vld [vmem:[%s0 + $0x10] sm:$0xf]
  %v32 = vld [vmem:[%s0 + $0x14] sm:$0xf]
  %v33 = vld [vmem:[%s0 + $0x18] sm:$0xf]
  %v34 = vld [vmem:[%s0 + $0x1c] sm:$0xf]
  %v35 = vld [vmem:[%s0 + $0x20] sm:$0xf]
  %v36 = vld [vmem:[%s0 + $0x24] sm:$0xf]
  %v37 = vld [vmem:[%s0 + $0x28] sm:$0xf]
  %v38 = vld [vmem:[%s0 + $0x2c] sm:$0xf]
  %v39 = vld [vmem:[%s0 + $0x30] sm:$0xf]
  %v40 = vld [vmem:[%s0 + $0x34] sm:$0xf]
  %v41 = vld [vmem:[%s0 + $0x38] sm:$0xf]
  %v42 = vld [vmem:[%s0 + $0x3c] sm:$0xf]
  %v43 = vld [vmem:[%s0 + $0x40] sm:$0xf]
  %v44 = vld [vmem:[%s0 + $0x44] sm:$0xf]
  %v45 = vld [vmem:[%s0 + $0x48] sm:$0xf]
  %v46 = vld [vmem:[%s0 + $0x4c] sm:$0xf]
  %v47 = vld [vmem:[%s0 + $0x50] sm:$0xf]
  %v48 = vld [vmem:[%s0 + $0x54] sm:$0xf]
  %v49 = vld [vmem:[%s0 + $0x58] sm:$0xf]
  %v50 = vld [vmem:[%s0 + $0x5c] sm:$0xf]
  %v51 = vld [vmem:[%s0 + $0x60] sm:$0xf]
  %v52 = vld [vmem:[%s0 + $0x64] sm:$0xf]
  %v53 = vld [vmem:[%s0 + $0x68] sm:$0xf]
  %v54 = vld [vmem:[%s0 + $0x6c] sm:$0xf]
  %v55 = vld [vmem:[%s0 + $0x70] sm:$0xf]
  %v56 = vld [vmem:[%s0 + $0x74] sm:$0xf]
  %v57 = vld [vmem:[%s0 + $0x78] sm:$0xf]
  %v58 = vld [vmem:[%s0 + $0x7c] sm:$0xf]
  %v59 = vld [vmem:[%s1] sm:$0xf]
  %v60 = vld [vmem:[%s1 + $0x4] sm:$0xf]
  %v61 = vld [vmem:[%s1 + $0x8] sm:$0xf]
  %v62 = vld [vmem:[%s1 + $0xc] sm:$0xf]
  %v63 = vld [vmem:[%s2] sm:$0x1]
  %v65 = vlaneseq
  %v66 = vshrl.u32 %v65, 7
  %v67 = vsub.s32 0, %v66
  %v68 = vrot.slane %v63, %v67
  %v102 = vunpack.c.l.b16 %v27
  %v103 = vunpack.c.l.b16 %v28
  %v104 = vunpack.c.l.b16 %v29
  %v105 = vunpack.c.l.b16 %v30
  %v106 = vunpack.c.l.b16 %v31
  %v107 = vunpack.c.l.b16 %v32
  %v108 = vunpack.c.l.b16 %v33
  %v109 = vunpack.c.l.b16 %v34
  %v110 = vunpack.c.l.b16 %v35
  %v111 = vunpack.c.l.b16 %v36
  %v112 = vunpack.c.l.b16 %v37
  %v113 = vunpack.c.l.b16 %v38
  %v114 = vunpack.c.l.b16 %v39
  %v115 = vunpack.c.l.b16 %v40
  %v116 = vunpack.c.l.b16 %v41
  %v117 = vunpack.c.l.b16 %v42
  %v118 = vunpack.c.l.b16 %v43
  %v119 = vunpack.c.l.b16 %v44
  %v120 = vunpack.c.l.b16 %v45
  %v121 = vunpack.c.l.b16 %v46
  %v122 = vunpack.c.l.b16 %v47
  %v123 = vunpack.c.l.b16 %v48
  %v124 = vunpack.c.l.b16 %v49
  %v125 = vunpack.c.l.b16 %v50
  %v126 = vunpack.c.l.b16 %v51
  %v127 = vunpack.c.l.b16 %v52
  %v128 = vunpack.c.l.b16 %v53
  %v129 = vunpack.c.l.b16 %v54
  %v130 = vunpack.c.l.b16 %v55
  %v131 = vunpack.c.l.b16 %v56
  %v132 = vunpack.c.l.b16 %v57
  %v133 = vunpack.c.l.b16 %v58
  %v134 = vpack.c.b16 %v103, %v102
  %v135 = vpack.c.b16 %v105, %v104
  %v136 = vpack.c.b16 %v107, %v106
  %v137 = vpack.c.b16 %v109, %v108
  %v138 = vpack.c.b16 %v111, %v110
  %v139 = vpack.c.b16 %v113, %v112
  %v140 = vpack.c.b16 %v115, %v114
  %v141 = vpack.c.b16 %v117, %v116
  %v142 = vpack.c.b16 %v119, %v118
  %v143 = vpack.c.b16 %v121, %v120
  %v144 = vpack.c.b16 %v123, %v122
  %v145 = vpack.c.b16 %v125, %v124
  %v146 = vpack.c.b16 %v127, %v126
  %v147 = vpack.c.b16 %v129, %v128
  %v148 = vpack.c.b16 %v131, %v130
  %v149 = vpack.c.b16 %v133, %v132
  %v154 = vunpack.c.l.b16 %v59
  %v155 = vunpack.c.l.b16 %v60
  %v156 = vunpack.c.l.b16 %v61
  %v157 = vunpack.c.l.b16 %v62
  %v158 = vpack.c.b16 %v155, %v154
  %v159 = vpack.c.b16 %v157, %v156
  %vm162 = vcmask 261120
  %v164 = vsel %vm162, %v134, 0
  %v167 = vsel %vm162, %v135, 0
  %v170 = vsel %vm162, %v136, 0
  %v173 = vsel %vm162, %v137, 0
  %v176 = vsel %vm162, %v138, 0
  %v179 = vsel %vm162, %v139, 0
  %v182 = vsel %vm162, %v140, 0
  %v185 = vsel %vm162, %v141, 0
  %v188 = vsel %vm162, %v142, 0
  %v191 = vsel %vm162, %v143, 0
  %v194 = vsel %vm162, %v144, 0
  %v197 = vsel %vm162, %v145, 0
  %v200 = vsel %vm162, %v146, 0
  %v203 = vsel %vm162, %v147, 0
  %v206 = vsel %vm162, %v148, 0
  %v209 = vsel %vm162, %v149, 0
  %211 = vmatprep.subr.bf16.mxu0 0
  %212 = vmatpush1.bf16.msra.mxu0 %v158
  %213 = vmatprep.subr.bf16.mxu0 0
  %214 = vmatpush1.bf16.msra.mxu0 %v159
  %215 = vmatprep.subr.bf16.mxu0 0
  %216 = vmatpush1.bf16.msra.mxu0 0
  %217 = vmatprep.subr.bf16.mxu0 0
  %218 = vmatpush1.bf16.msra.mxu0 0
  %219 = vmatprep.subr.bf16.mxu0 0
  %220 = vmatpush1.bf16.msra.mxu0 0
  %221 = vmatprep.subr.bf16.mxu0 0
  %222 = vmatpush1.bf16.msra.mxu0 0
  %223 = vmatprep.subr.bf16.mxu0 0
  %224 = vmatpush1.bf16.msra.mxu0 0
  %225 = vmatprep.subr.bf16.mxu0 0
  %226 = vmatpush1.bf16.msra.mxu0 0
  %227 = vmatprep.subr.bf16.mxu0 0
  %228 = vmatpush1.bf16.msra.mxu0 0
  %229 = vmatprep.subr.bf16.mxu0 0
  %230 = vmatpush1.bf16.msra.mxu0 0
  %231 = vmatprep.subr.bf16.mxu0 0
  %232 = vmatpush1.bf16.msra.mxu0 0
  %233 = vmatprep.subr.bf16.mxu0 0
  %234 = vmatpush1.bf16.msra.mxu0 0
  %235 = vmatprep.subr.bf16.mxu0 0
  %236 = vmatpush1.bf16.msra.mxu0 0
  %237 = vmatprep.subr.bf16.mxu0 0
  %238 = vmatpush1.bf16.msra.mxu0 0
  %239 = vmatprep.subr.bf16.mxu0 0
  %240 = vmatpush1.bf16.msra.mxu0 0
  %241 = vmatprep.subr.bf16.mxu0 0
  %242 = vmatpush1.bf16.msra.mxu0 0
  %243 = vmatprep.mubr.bf16.mxu0 0
  %244 = vmatmul.mubr.bf16.gmra.mrb[0].mxu0 %v164
  %v245 = vpop.f32.mrb[0].mxu0
  %v246 = vadd.f32 %v68, %v245
  %v247 = vpop.f32.mrb[0].mxu0
  %v248 = vpop.f32.mrb[0].mxu0
  %v249 = vadd.f32 %v68, %v248
  %v250 = vpop.f32.mrb[0].mxu0
  %251 = vmatprep.mubr.bf16.mxu0 0
  %252 = vmatmul.mubr.bf16.gmra.mrb[0].mxu0 %v167
  %v253 = vpop.f32.mrb[0].mxu0
  %v254 = vadd.f32 %v68, %v253
  %v255 = vpop.f32.mrb[0].mxu0
  %v256 = vpop.f32.mrb[0].mxu0
  %v257 = vadd.f32 %v68, %v256
  %v258 = vpop.f32.mrb[0].mxu0
  %259 = vmatprep.mubr.bf16.mxu0 0
  %260 = vmatmul.mubr.bf16.gmra.mrb[0].mxu0 %v170
  %v261 = vpop.f32.mrb[0].mxu0
  %v262 = vadd.f32 %v68, %v261
  %v263 = vpop.f32.mrb[0].mxu0
  %v264 = vpop.f32.mrb[0].mxu0
  %v265 = vadd.f32 %v68, %v264
  %v266 = vpop.f32.mrb[0].mxu0
  %267 = vmatprep.mubr.bf16.mxu0 0
  %268 = vmatmul.mubr.bf16.gmra.mrb[0].mxu0 %v173
  %v269 = vpop.f32.mrb[0].mxu0
  %v270 = vadd.f32 %v68, %v269
  %v271 = vpop.f32.mrb[0].mxu0
  %v272 = vpop.f32.mrb[0].mxu0
  %v273 = vadd.f32 %v68, %v272
  %v274 = vpop.f32.mrb[0].mxu0
  %275 = vmatprep.mubr.bf16.mxu0 0
  %276 = vmatmul.mubr.bf16.gmra.mrb[0].mxu0 %v176
  %v277 = vpop.f32.mrb[0].mxu0
  %v278 = vadd.f32 %v68, %v277
  %v279 = vpop.f32.mrb[0].mxu0
  %v280 = vpop.f32.mrb[0].mxu0
  %v281 = vadd.f32 %v68, %v280
  %v282 = vpop.f32.mrb[0].mxu0
  %283 = vmatprep.mubr.bf16.mxu0 0
  %284 = vmatmul.mubr.bf16.gmra.mrb[0].mxu0 %v179
  %v285 = vpop.f32.mrb[0].mxu0
  %v286 = vadd.f32 %v68, %v285
  %v287 = vpop.f32.mrb[0].mxu0
  %v288 = vpop.f32.mrb[0].mxu0
  %v289 = vadd.f32 %v68, %v288
  %v290 = vpop.f32.mrb[0].mxu0
  %291 = vmatprep.mubr.bf16.mxu0 0
  %292 = vmatmul.mubr.bf16.gmra.mrb[0].mxu0 %v182
  %v293 = vpop.f32.mrb[0].mxu0
  %v294 = vadd.f32 %v68, %v293
  %v295 = vpop.f32.mrb[0].mxu0
  %v296 = vpop.f32.mrb[0].mxu0
  %v297 = vadd.f32 %v68, %v296
  %v298 = vpop.f32.mrb[0].mxu0
  %299 = vmatprep.mubr.bf16.mxu0 0
  %300 = vmatmul.mubr.bf16.gmra.mrb[0].mxu0 %v185
  %v301 = vpop.f32.mrb[0].mxu0
  %v302 = vadd.f32 %v68, %v301
  %v303 = vpop.f32.mrb[0].mxu0
  %v304 = vpop.f32.mrb[0].mxu0
  %v305 = vadd.f32 %v68, %v304
  %v306 = vpop.f32.mrb[0].mxu0
  %307 = vmatprep.mubr.bf16.mxu0 0
  %308 = vmatmul.mubr.bf16.gmra.mrb[0].mxu0 %v188
  %v309 = vpop.f32.mrb[0].mxu0
  %v310 = vadd.f32 %v68, %v309
  %v311 = vpop.f32.mrb[0].mxu0
  %v312 = vpop.f32.mrb[0].mxu0
  %v313 = vadd.f32 %v68, %v312
  %v314 = vpop.f32.mrb[0].mxu0
  %315 = vmatprep.mubr.bf16.mxu0 0
  %316 = vmatmul.mubr.bf16.gmra.mrb[0].mxu0 %v191
  %v317 = vpop.f32.mrb[0].mxu0
  %v318 = vadd.f32 %v68, %v317
  %v319 = vpop.f32.mrb[0].mxu0
  %v320 = vpop.f32.mrb[0].mxu0
  %v321 = vadd.f32 %v68, %v320
  %v322 = vpop.f32.mrb[0].mxu0
  %323 = vmatprep.mubr.bf16.mxu0 0
  %324 = vmatmul.mubr.bf16.gmra.mrb[0].mxu0 %v194
  %v325 = vpop.f32.mrb[0].mxu0
  %v326 = vadd.f32 %v68, %v325
  %v327 = vpop.f32.mrb[0].mxu0
  %v328 = vpop.f32.mrb[0].mxu0
  %v329 = vadd.f32 %v68, %v328
  %v330 = vpop.f32.mrb[0].mxu0
  %331 = vmatprep.mubr.bf16.mxu0 0
  %332 = vmatmul.mubr.bf16.gmra.mrb[0].mxu0 %v197
  %v333 = vpop.f32.mrb[0].mxu0
  %v334 = vadd.f32 %v68, %v333
  %v335 = vpop.f32.mrb[0].mxu0
  %v336 = vpop.f32.mrb[0].mxu0
  %v337 = vadd.f32 %v68, %v336
  %v338 = vpop.f32.mrb[0].mxu0
  %339 = vmatprep.mubr.bf16.mxu0 0
  %340 = vmatmul.mubr.bf16.gmra.mrb[0].mxu0 %v200
  %v341 = vpop.f32.mrb[0].mxu0
  %v342 = vadd.f32 %v68, %v341
  %v343 = vpop.f32.mrb[0].mxu0
  %v344 = vpop.f32.mrb[0].mxu0
  %v345 = vadd.f32 %v68, %v344
  %v346 = vpop.f32.mrb[0].mxu0
  %347 = vmatprep.mubr.bf16.mxu0 0
  %348 = vmatmul.mubr.bf16.gmra.mrb[0].mxu0 %v203
  %v349 = vpop.f32.mrb[0].mxu0
  %v350 = vadd.f32 %v68, %v349
  %v351 = vpop.f32.mrb[0].mxu0
  %v352 = vpop.f32.mrb[0].mxu0
  %v353 = vadd.f32 %v68, %v352
  %v354 = vpop.f32.mrb[0].mxu0
  %355 = vmatprep.mubr.bf16.mxu0 0
  %356 = vmatmul.mubr.bf16.gmra.mrb[0].mxu0 %v206
  %v357 = vpop.f32.mrb[0].mxu0
  %v358 = vadd.f32 %v68, %v357
  %v359 = vpop.f32.mrb[0].mxu0
  %v360 = vpop.f32.mrb[0].mxu0
  %v361 = vadd.f32 %v68, %v360
  %v362 = vpop.f32.mrb[0].mxu0
  %363 = vmatprep.mubr.bf16.mxu0 0
  %364 = vmatmul.mubr.bf16.gmra.mrb[0].mxu0 %v209
  %v365 = vpop.f32.mrb[0].mxu0
  %v366 = vadd.f32 %v68, %v365
  %v367 = vpop.f32.mrb[0].mxu0
  %v368 = vpop.f32.mrb[0].mxu0
  %v369 = vadd.f32 %v68, %v368
  %v370 = vpop.f32.mrb[0].mxu0
  %371 = vdwg.mxu0
  %v372 = vmax.f32 %v246, 0.0
  %v373 = vmax.f32 %v249, 0.0
  %v374 = vmax.f32 %v254, 0.0
  %v375 = vmax.f32 %v257, 0.0
  %v376 = vmax.f32 %v262, 0.0
  %v377 = vmax.f32 %v265, 0.0
  %v378 = vmax.f32 %v270, 0.0
  %v379 = vmax.f32 %v273, 0.0
  %v380 = vmax.f32 %v278, 0.0
  %v381 = vmax.f32 %v281, 0.0
  %v382 = vmax.f32 %v286, 0.0
  %v383 = vmax.f32 %v289, 0.0
  %v384 = vmax.f32 %v294, 0.0
  %v385 = vmax.f32 %v297, 0.0
  %v386 = vmax.f32 %v302, 0.0
  %v387 = vmax.f32 %v305, 0.0
  %v388 = vmax.f32 %v310, 0.0
  %v389 = vmax.f32 %v313, 0.0
  %v390 = vmax.f32 %v318, 0.0
  %v391 = vmax.f32 %v321, 0.0
  %v392 = vmax.f32 %v326, 0.0
  %v393 = vmax.f32 %v329, 0.0
  %v394 = vmax.f32 %v334, 0.0
  %v395 = vmax.f32 %v337, 0.0
  %v396 = vmax.f32 %v342, 0.0
  %v397 = vmax.f32 %v345, 0.0
  %v398 = vmax.f32 %v350, 0.0
  %v399 = vmax.f32 %v353, 0.0
  %v400 = vmax.f32 %v358, 0.0
  %v401 = vmax.f32 %v361, 0.0
  %v402 = vmax.f32 %v366, 0.0
  %v403 = vmax.f32 %v369, 0.0
  %v404 = vpack.c.bf16 %v373, %v372
  %v405 = vpack.c.bf16 %v375, %v374
  %v406 = vpack.c.bf16 %v377, %v376
  %v407 = vpack.c.bf16 %v379, %v378
  %v408 = vpack.c.bf16 %v381, %v380
  %v409 = vpack.c.bf16 %v383, %v382
  %v410 = vpack.c.bf16 %v385, %v384
  %v411 = vpack.c.bf16 %v387, %v386
  %v412 = vpack.c.bf16 %v389, %v388
  %v413 = vpack.c.bf16 %v391, %v390
  %v414 = vpack.c.bf16 %v393, %v392
  %v415 = vpack.c.bf16 %v395, %v394
  %v416 = vpack.c.bf16 %v397, %v396
  %v417 = vpack.c.bf16 %v399, %v398
  %v418 = vpack.c.bf16 %v401, %v400
  %v419 = vpack.c.bf16 %v403, %v402
  %v420 = vld [vmem:[%s3] sm:$0xf]
  %v421 = vld [vmem:[%s3 + $0x4] sm:$0xf]
  %v422 = vld [vmem:[%s3 + $0x8] sm:$0xf]
  %v423 = vld [vmem:[%s3 + $0xc] sm:$0xf]
  %v424 = vld [vmem:[%s3 + $0x10] sm:$0xf]
  %v425 = vld [vmem:[%s3 + $0x14] sm:$0xf]
  %v426 = vld [vmem:[%s3 + $0x18] sm:$0xf]
  %v427 = vld [vmem:[%s3 + $0x1c] sm:$0xf]
  %v428 = vld [vmem:[%s4] sm:$0x1]
  %v430 = vlaneseq
  %v431 = vshrl.u32 %v430, 7
  %v432 = vsub.s32 0, %v431
  %v433 = vrot.slane %v428, %v432
  %v443 = vunpack.c.l.b16 %v420
  %v444 = vunpack.c.l.b16 %v421
  %v445 = vunpack.c.l.b16 %v422
  %v446 = vunpack.c.l.b16 %v423
  %v447 = vunpack.c.l.b16 %v424
  %v448 = vunpack.c.l.b16 %v425
  %v449 = vunpack.c.l.b16 %v426
  %v450 = vunpack.c.l.b16 %v427
  %v451 = vpack.c.b16 %v444, %v443
  %v452 = vpack.c.b16 %v446, %v445
  %v453 = vpack.c.b16 %v448, %v447
  %v454 = vpack.c.b16 %v450, %v449
  %vm459 = vcmask 523264
  %v461 = vsel %vm459, %v404, 0
  %v464 = vsel %vm459, %v405, 0
  %v467 = vsel %vm459, %v406, 0
  %v470 = vsel %vm459, %v407, 0
  %v473 = vsel %vm459, %v408, 0
  %v476 = vsel %vm459, %v409, 0
  %v479 = vsel %vm459, %v410, 0
  %v482 = vsel %vm459, %v411, 0
  %v485 = vsel %vm459, %v412, 0
  %v488 = vsel %vm459, %v413, 0
  %v491 = vsel %vm459, %v414, 0
  %v494 = vsel %vm459, %v415, 0
  %v497 = vsel %vm459, %v416, 0
  %v500 = vsel %vm459, %v417, 0
  %v503 = vsel %vm459, %v418, 0
  %v506 = vsel %vm459, %v419, 0
  %508 = vmatprep.subr.bf16.mxu0 0
  %509 = vmatpush1.bf16.msra.mxu0 %v451
  %510 = vmatprep.subr.bf16.mxu0 0
  %511 = vmatpush1.bf16.msra.mxu0 %v452
  %512 = vmatprep.subr.bf16.mxu0 0
  %513 = vmatpush1.bf16.msra.mxu0 %v453
  %514 = vmatprep.subr.bf16.mxu0 0
  %515 = vmatpush1.bf16.msra.mxu0 %v454
  %516 = vmatprep.subr.bf16.mxu0 0
  %517 = vmatpush1.bf16.msra.mxu0 0
  %518 = vmatprep.subr.bf16.mxu0 0
  %519 = vmatpush1.bf16.msra.mxu0 0
  %520 = vmatprep.subr.bf16.mxu0 0
  %521 = vmatpush1.bf16.msra.mxu0 0
  %522 = vmatprep.subr.bf16.mxu0 0
  %523 = vmatpush1.bf16.msra.mxu0 0
  %524 = vmatprep.subr.bf16.mxu0 0
  %525 = vmatpush1.bf16.msra.mxu0 0
  %526 = vmatprep.subr.bf16.mxu0 0
  %527 = vmatpush1.bf16.msra.mxu0 0
  %528 = vmatprep.subr.bf16.mxu0 0
  %529 = vmatpush1.bf16.msra.mxu0 0
  %530 = vmatprep.subr.bf16.mxu0 0
  %531 = vmatpush1.bf16.msra.mxu0 0
  %532 = vmatprep.subr.bf16.mxu0 0
  %533 = vmatpush1.bf16.msra.mxu0 0
  %534 = vmatprep.subr.bf16.mxu0 0
  %535 = vmatpush1.bf16.msra.mxu0 0
  %536 = vmatprep.subr.bf16.mxu0 0
  %537 = vmatpush1.bf16.msra.mxu0 0
  %538 = vmatprep.subr.bf16.mxu0 0
  %539 = vmatpush1.bf16.msra.mxu0 0
  %540 = vmatprep.mubr.bf16.mxu0 0
  %541 = vmatmul.mubr.bf16.gmra.mrb[0].mxu0 %v461
  %v542 = vpop.f32.mrb[0].mxu0
  %v543 = vadd.f32 %v433, %v542
  %v544 = vpop.f32.mrb[0].mxu0
  %v545 = vpop.f32.mrb[0].mxu0
  %v546 = vadd.f32 %v433, %v545
  %v547 = vpop.f32.mrb[0].mxu0
  %548 = vmatprep.mubr.bf16.mxu0 0
  %549 = vmatmul.mubr.bf16.gmra.mrb[0].mxu0 %v464
  %v550 = vpop.f32.mrb[0].mxu0
  %v551 = vadd.f32 %v433, %v550
  %v552 = vpop.f32.mrb[0].mxu0
  %v553 = vpop.f32.mrb[0].mxu0
  %v554 = vadd.f32 %v433, %v553
  %v555 = vpop.f32.mrb[0].mxu0
  %556 = vmatprep.mubr.bf16.mxu0 0
  %557 = vmatmul.mubr.bf16.gmra.mrb[0].mxu0 %v467
  %v558 = vpop.f32.mrb[0].mxu0
  %v559 = vadd.f32 %v433, %v558
  %v560 = vpop.f32.mrb[0].mxu0
  %v561 = vpop.f32.mrb[0].mxu0
  %v562 = vadd.f32 %v433, %v561
  %v563 = vpop.f32.mrb[0].mxu0
  %564 = vmatprep.mubr.bf16.mxu0 0
  %565 = vmatmul.mubr.bf16.gmra.mrb[0].mxu0 %v470
  %v566 = vpop.f32.mrb[0].mxu0
  %v567 = vadd.f32 %v433, %v566
  %v568 = vpop.f32.mrb[0].mxu0
  %v569 = vpop.f32.mrb[0].mxu0
  %v570 = vadd.f32 %v433, %v569
  %v571 = vpop.f32.mrb[0].mxu0
  %572 = vmatprep.mubr.bf16.mxu0 0
  %573 = vmatmul.mubr.bf16.gmra.mrb[0].mxu0 %v473
  %v574 = vpop.f32.mrb[0].mxu0
  %v575 = vadd.f32 %v433, %v574
  %v576 = vpop.f32.mrb[0].mxu0
  %v577 = vpop.f32.mrb[0].mxu0
  %v578 = vadd.f32 %v433, %v577
  %v579 = vpop.f32.mrb[0].mxu0
  %580 = vmatprep.mubr.bf16.mxu0 0
  %581 = vmatmul.mubr.bf16.gmra.mrb[0].mxu0 %v476
  %v582 = vpop.f32.mrb[0].mxu0
  %v583 = vadd.f32 %v433, %v582
  %v584 = vpop.f32.mrb[0].mxu0
  %v585 = vpop.f32.mrb[0].mxu0
  %v586 = vadd.f32 %v433, %v585
  %v587 = vpop.f32.mrb[0].mxu0
  %588 = vmatprep.mubr.bf16.mxu0 0
  %589 = vmatmul.mubr.bf16.gmra.mrb[0].mxu0 %v479
  %v590 = vpop.f32.mrb[0].mxu0
  %v591 = vadd.f32 %v433, %v590
  %v592 = vpop.f32.mrb[0].mxu0
  %v593 = vpop.f32.mrb[0].mxu0
  %v594 = vadd.f32 %v433, %v593
  %v595 = vpop.f32.mrb[0].mxu0
  %596 = vmatprep.mubr.bf16.mxu0 0
  %597 = vmatmul.mubr.bf16.gmra.mrb[0].mxu0 %v482
  %v598 = vpop.f32.mrb[0].mxu0
  %v599 = vadd.f32 %v433, %v598
  %v600 = vpop.f32.mrb[0].mxu0
  %v601 = vpop.f32.mrb[0].mxu0
  %v602 = vadd.f32 %v433, %v601
  %v603 = vpop.f32.mrb[0].mxu0
  %604 = vmatprep.mubr.bf16.mxu0 0
  %605 = vmatmul.mubr.bf16.gmra.mrb[0].mxu0 %v485
  %v606 = vpop.f32.mrb[0].mxu0
  %v607 = vadd.f32 %v433, %v606
  %v608 = vpop.f32.mrb[0].mxu0
  %v609 = vpop.f32.mrb[0].mxu0
  %v610 = vadd.f32 %v433, %v609
  %v611 = vpop.f32.mrb[0].mxu0
  %612 = vmatprep.mubr.bf16.mxu0 0
  %613 = vmatmul.mubr.bf16.gmra.mrb[0].mxu0 %v488
  %v614 = vpop.f32.mrb[0].mxu0
  %v615 = vadd.f32 %v433, %v614
  %v616 = vpop.f32.mrb[0].mxu0
  %v617 = vpop.f32.mrb[0].mxu0
  %v618 = vadd.f32 %v433, %v617
  %v619 = vpop.f32.mrb[0].mxu0
  %620 = vmatprep.mubr.bf16.mxu0 0
  %621 = vmatmul.mubr.bf16.gmra.mrb[0].mxu0 %v491
  %v622 = vpop.f32.mrb[0].mxu0
  %v623 = vadd.f32 %v433, %v622
  %v624 = vpop.f32.mrb[0].mxu0
  %v625 = vpop.f32.mrb[0].mxu0
  %v626 = vadd.f32 %v433, %v625
  %v627 = vpop.f32.mrb[0].mxu0
  %628 = vmatprep.mubr.bf16.mxu0 0
  %629 = vmatmul.mubr.bf16.gmra.mrb[0].mxu0 %v494
  %v630 = vpop.f32.mrb[0].mxu0
  %v631 = vadd.f32 %v433, %v630
  %v632 = vpop.f32.mrb[0].mxu0
  %v633 = vpop.f32.mrb[0].mxu0
  %v634 = vadd.f32 %v433, %v633
  %v635 = vpop.f32.mrb[0].mxu0
  %636 = vmatprep.mubr.bf16.mxu0 0
  %637 = vmatmul.mubr.bf16.gmra.mrb[0].mxu0 %v497
  %v638 = vpop.f32.mrb[0].mxu0
  %v639 = vadd.f32 %v433, %v638
  %v640 = vpop.f32.mrb[0].mxu0
  %v641 = vpop.f32.mrb[0].mxu0
  %v642 = vadd.f32 %v433, %v641
  %v643 = vpop.f32.mrb[0].mxu0
  %644 = vmatprep.mubr.bf16.mxu0 0
  %645 = vmatmul.mubr.bf16.gmra.mrb[0].mxu0 %v500
  %v646 = vpop.f32.mrb[0].mxu0
  %v647 = vadd.f32 %v433, %v646
  %v648 = vpop.f32.mrb[0].mxu0
  %v649 = vpop.f32.mrb[0].mxu0
  %v650 = vadd.f32 %v433, %v649
  %v651 = vpop.f32.mrb[0].mxu0
  %652 = vmatprep.mubr.bf16.mxu0 0
  %653 = vmatmul.mubr.bf16.gmra.mrb[0].mxu0 %v503
  %v654 = vpop.f32.mrb[0].mxu0
  %v655 = vadd.f32 %v433, %v654
  %v656 = vpop.f32.mrb[0].mxu0
  %v657 = vpop.f32.mrb[0].mxu0
  %v658 = vadd.f32 %v433, %v657
  %v659 = vpop.f32.mrb[0].mxu0
  %660 = vmatprep.mubr.bf16.mxu0 0
  %661 = vmatmul.mubr.bf16.gmra.mrb[0].mxu0 %v506
  %v662 = vpop.f32.mrb[0].mxu0
  %v663 = vadd.f32 %v433, %v662
  %v664 = vpop.f32.mrb[0].mxu0
  %v665 = vpop.f32.mrb[0].mxu0
  %v666 = vadd.f32 %v433, %v665
  %v667 = vpop.f32.mrb[0].mxu0
  %668 = vdwg.mxu0
  %v669 = vmax.f32 %v543, 0.0
  %v670 = vmax.f32 %v546, 0.0
  %v671 = vmax.f32 %v551, 0.0
  %v672 = vmax.f32 %v554, 0.0
  %v673 = vmax.f32 %v559, 0.0
  %v674 = vmax.f32 %v562, 0.0
  %v675 = vmax.f32 %v567, 0.0
  %v676 = vmax.f32 %v570, 0.0
  %v677 = vmax.f32 %v575, 0.0
  %v678 = vmax.f32 %v578, 0.0
  %v679 = vmax.f32 %v583, 0.0
  %v680 = vmax.f32 %v586, 0.0
  %v681 = vmax.f32 %v591, 0.0
  %v682 = vmax.f32 %v594, 0.0
  %v683 = vmax.f32 %v599, 0.0
  %v684 = vmax.f32 %v602, 0.0
  %v685 = vmax.f32 %v607, 0.0
  %v686 = vmax.f32 %v610, 0.0
  %v687 = vmax.f32 %v615, 0.0
  %v688 = vmax.f32 %v618, 0.0
  %v689 = vmax.f32 %v623, 0.0
  %v690 = vmax.f32 %v626, 0.0
  %v691 = vmax.f32 %v631, 0.0
  %v692 = vmax.f32 %v634, 0.0
  %v693 = vmax.f32 %v639, 0.0
  %v694 = vmax.f32 %v642, 0.0
  %v695 = vmax.f32 %v647, 0.0
  %v696 = vmax.f32 %v650, 0.0
  %v697 = vmax.f32 %v655, 0.0
  %v698 = vmax.f32 %v658, 0.0
  %v699 = vmax.f32 %v663, 0.0
  %v700 = vmax.f32 %v666, 0.0
  %v701 = vpack.c.bf16 %v670, %v669
  %v702 = vpack.c.bf16 %v672, %v671
  %v703 = vpack.c.bf16 %v674, %v673
  %v704 = vpack.c.bf16 %v676, %v675
  %v705 = vpack.c.bf16 %v678, %v677
  %v706 = vpack.c.bf16 %v680, %v679
  %v707 = vpack.c.bf16 %v682, %v681
  %v708 = vpack.c.bf16 %v684, %v683
  %v709 = vpack.c.bf16 %v686, %v685
  %v710 = vpack.c.bf16 %v688, %v687
  %v711 = vpack.c.bf16 %v690, %v689
  %v712 = vpack.c.bf16 %v692, %v691
  %v713 = vpack.c.bf16 %v694, %v693
  %v714 = vpack.c.bf16 %v696, %v695
  %v715 = vpack.c.bf16 %v698, %v697
  %v716 = vpack.c.bf16 %v700, %v699
  %v717 = vld [vmem:[%s5] sm:$0xf]
  %v718 = vld [vmem:[%s5 + $0x4] sm:$0xf]
  %v719 = vld [vmem:[%s5 + $0x8] sm:$0xf]
  %v720 = vld [vmem:[%s5 + $0xc] sm:$0xf]
  %v721 = vld [vmem:[%s5 + $0x10] sm:$0xf]
  %v722 = vld [vmem:[%s5 + $0x14] sm:$0xf]
  %v723 = vld [vmem:[%s5 + $0x18] sm:$0xf]
  %v724 = vld [vmem:[%s5 + $0x1c] sm:$0xf]
  %v725 = vld [vmem:[%s6] sm:$0x1]
  %v727 = vlaneseq
  %v728 = vshrl.u32 %v727, 7
  %v729 = vsub.s32 0, %v728
  %v730 = vrot.slane %v725, %v729
  %v740 = vunpack.c.l.b16 %v717
  %v741 = vunpack.c.l.b16 %v718
  %v742 = vunpack.c.l.b16 %v719
  %v743 = vunpack.c.l.b16 %v720
  %v744 = vunpack.c.l.b16 %v721
  %v745 = vunpack.c.l.b16 %v722
  %v746 = vunpack.c.l.b16 %v723
  %v747 = vunpack.c.l.b16 %v724
  %v748 = vpack.c.b16 %v741, %v740
  %v749 = vpack.c.b16 %v743, %v742
  %v750 = vpack.c.b16 %v745, %v744
  %v751 = vpack.c.b16 %v747, %v746
  %v757 = vsel %vm459, %v701, 0
  %v760 = vsel %vm459, %v702, 0
  %v763 = vsel %vm459, %v703, 0
  %v766 = vsel %vm459, %v704, 0
  %v769 = vsel %vm459, %v705, 0
  %v772 = vsel %vm459, %v706, 0
  %v775 = vsel %vm459, %v707, 0
  %v778 = vsel %vm459, %v708, 0
  %v781 = vsel %vm459, %v709, 0
  %v784 = vsel %vm459, %v710, 0
  %v787 = vsel %vm459, %v711, 0
  %v790 = vsel %vm459, %v712, 0
  %v793 = vsel %vm459, %v713, 0
  %v796 = vsel %vm459, %v714, 0
  %v799 = vsel %vm459, %v715, 0
  %v802 = vsel %vm459, %v716, 0
  %804 = vmatprep.subr.bf16.mxu0 0
  %805 = vmatpush1.bf16.msra.mxu0 %v748
  %806 = vmatprep.subr.bf16.mxu0 0
  %807 = vmatpush1.bf16.msra.mxu0 %v749
  %808 = vmatprep.subr.bf16.mxu0 0
  %809 = vmatpush1.bf16.msra.mxu0 %v750
  %810 = vmatprep.subr.bf16.mxu0 0
  %811 = vmatpush1.bf16.msra.mxu0 %v751
  %812 = vmatprep.subr.bf16.mxu0 0
  %813 = vmatpush1.bf16.msra.mxu0 0
  %814 = vmatprep.subr.bf16.mxu0 0
  %815 = vmatpush1.bf16.msra.mxu0 0
  %816 = vmatprep.subr.bf16.mxu0 0
  %817 = vmatpush1.bf16.msra.mxu0 0
  %818 = vmatprep.subr.bf16.mxu0 0
  %819 = vmatpush1.bf16.msra.mxu0 0
  %820 = vmatprep.subr.bf16.mxu0 0
  %821 = vmatpush1.bf16.msra.mxu0 0
  %822 = vmatprep.subr.bf16.mxu0 0
  %823 = vmatpush1.bf16.msra.mxu0 0
  %824 = vmatprep.subr.bf16.mxu0 0
  %825 = vmatpush1.bf16.msra.mxu0 0
  %826 = vmatprep.subr.bf16.mxu0 0
  %827 = vmatpush1.bf16.msra.mxu0 0
  %828 = vmatprep.subr.bf16.mxu0 0
  %829 = vmatpush1.bf16.msra.mxu0 0
  %830 = vmatprep.subr.bf16.mxu0 0
  %831 = vmatpush1.bf16.msra.mxu0 0
  %832 = vmatprep.subr.bf16.mxu0 0
  %833 = vmatpush1.bf16.msra.mxu0 0
  %834 = vmatprep.subr.bf16.mxu0 0
  %835 = vmatpush1.bf16.msra.mxu0 0
  %836 = vmatprep.mubr.bf16.mxu0 0
  %837 = vmatmul.mubr.bf16.gmra.mrb[0].mxu0 %v757
  %v838 = vpop.f32.mrb[0].mxu0
  %v839 = vadd.f32 %v730, %v838
  %v840 = vpop.f32.mrb[0].mxu0
  %v841 = vpop.f32.mrb[0].mxu0
  %v842 = vadd.f32 %v730, %v841
  %v843 = vpop.f32.mrb[0].mxu0
  %844 = vmatprep.mubr.bf16.mxu0 0
  %845 = vmatmul.mubr.bf16.gmra.mrb[0].mxu0 %v760
  %v846 = vpop.f32.mrb[0].mxu0
  %v847 = vadd.f32 %v730, %v846
  %v848 = vpop.f32.mrb[0].mxu0
  %v849 = vpop.f32.mrb[0].mxu0
  %v850 = vadd.f32 %v730, %v849
  %v851 = vpop.f32.mrb[0].mxu0
  %852 = vmatprep.mubr.bf16.mxu0 0
  %853 = vmatmul.mubr.bf16.gmra.mrb[0].mxu0 %v763
  %v854 = vpop.f32.mrb[0].mxu0
  %v855 = vadd.f32 %v730, %v854
  %v856 = vpop.f32.mrb[0].mxu0
  %v857 = vpop.f32.mrb[0].mxu0
  %v858 = vadd.f32 %v730, %v857
  %v859 = vpop.f32.mrb[0].mxu0
  %860 = vmatprep.mubr.bf16.mxu0 0
  %861 = vmatmul.mubr.bf16.gmra.mrb[0].mxu0 %v766
  %v862 = vpop.f32.mrb[0].mxu0
  %v863 = vadd.f32 %v730, %v862
  %v864 = vpop.f32.mrb[0].mxu0
  %v865 = vpop.f32.mrb[0].mxu0
  %v866 = vadd.f32 %v730, %v865
  %v867 = vpop.f32.mrb[0].mxu0
  %868 = vmatprep.mubr.bf16.mxu0 0
  %869 = vmatmul.mubr.bf16.gmra.mrb[0].mxu0 %v769
  %v870 = vpop.f32.mrb[0].mxu0
  %v871 = vadd.f32 %v730, %v870
  %v872 = vpop.f32.mrb[0].mxu0
  %v873 = vpop.f32.mrb[0].mxu0
  %v874 = vadd.f32 %v730, %v873
  %v875 = vpop.f32.mrb[0].mxu0
  %876 = vmatprep.mubr.bf16.mxu0 0
  %877 = vmatmul.mubr.bf16.gmra.mrb[0].mxu0 %v772
  %v878 = vpop.f32.mrb[0].mxu0
  %v879 = vadd.f32 %v730, %v878
  %v880 = vpop.f32.mrb[0].mxu0
  %v881 = vpop.f32.mrb[0].mxu0
  %v882 = vadd.f32 %v730, %v881
  %v883 = vpop.f32.mrb[0].mxu0
  %884 = vmatprep.mubr.bf16.mxu0 0
  %885 = vmatmul.mubr.bf16.gmra.mrb[0].mxu0 %v775
  %v886 = vpop.f32.mrb[0].mxu0
  %v887 = vadd.f32 %v730, %v886
  %v888 = vpop.f32.mrb[0].mxu0
  %v889 = vpop.f32.mrb[0].mxu0
  %v890 = vadd.f32 %v730, %v889
  %v891 = vpop.f32.mrb[0].mxu0
  %892 = vmatprep.mubr.bf16.mxu0 0
  %893 = vmatmul.mubr.bf16.gmra.mrb[0].mxu0 %v778
  %v894 = vpop.f32.mrb[0].mxu0
  %v895 = vadd.f32 %v730, %v894
  %v896 = vpop.f32.mrb[0].mxu0
  %v897 = vpop.f32.mrb[0].mxu0
  %v898 = vadd.f32 %v730, %v897
  %v899 = vpop.f32.mrb[0].mxu0
  %900 = vmatprep.mubr.bf16.mxu0 0
  %901 = vmatmul.mubr.bf16.gmra.mrb[0].mxu0 %v781
  %v902 = vpop.f32.mrb[0].mxu0
  %v903 = vadd.f32 %v730, %v902
  %v904 = vpop.f32.mrb[0].mxu0
  %v905 = vpop.f32.mrb[0].mxu0
  %v906 = vadd.f32 %v730, %v905
  %v907 = vpop.f32.mrb[0].mxu0
  %908 = vmatprep.mubr.bf16.mxu0 0
  %909 = vmatmul.mubr.bf16.gmra.mrb[0].mxu0 %v784
  %v910 = vpop.f32.mrb[0].mxu0
  %v911 = vadd.f32 %v730, %v910
  %v912 = vpop.f32.mrb[0].mxu0
  %v913 = vpop.f32.mrb[0].mxu0
  %v914 = vadd.f32 %v730, %v913
  %v915 = vpop.f32.mrb[0].mxu0
  %916 = vmatprep.mubr.bf16.mxu0 0
  %917 = vmatmul.mubr.bf16.gmra.mrb[0].mxu0 %v787
  %v918 = vpop.f32.mrb[0].mxu0
  %v919 = vadd.f32 %v730, %v918
  %v920 = vpop.f32.mrb[0].mxu0
  %v921 = vpop.f32.mrb[0].mxu0
  %v922 = vadd.f32 %v730, %v921
  %v923 = vpop.f32.mrb[0].mxu0
  %924 = vmatprep.mubr.bf16.mxu0 0
  %925 = vmatmul.mubr.bf16.gmra.mrb[0].mxu0 %v790
  %v926 = vpop.f32.mrb[0].mxu0
  %v927 = vadd.f32 %v730, %v926
  %v928 = vpop.f32.mrb[0].mxu0
  %v929 = vpop.f32.mrb[0].mxu0
  %v930 = vadd.f32 %v730, %v929
  %v931 = vpop.f32.mrb[0].mxu0
  %932 = vmatprep.mubr.bf16.mxu0 0
  %933 = vmatmul.mubr.bf16.gmra.mrb[0].mxu0 %v793
  %v934 = vpop.f32.mrb[0].mxu0
  %v935 = vadd.f32 %v730, %v934
  %v936 = vpop.f32.mrb[0].mxu0
  %v937 = vpop.f32.mrb[0].mxu0
  %v938 = vadd.f32 %v730, %v937
  %v939 = vpop.f32.mrb[0].mxu0
  %940 = vmatprep.mubr.bf16.mxu0 0
  %941 = vmatmul.mubr.bf16.gmra.mrb[0].mxu0 %v796
  %v942 = vpop.f32.mrb[0].mxu0
  %v943 = vadd.f32 %v730, %v942
  %v944 = vpop.f32.mrb[0].mxu0
  %v945 = vpop.f32.mrb[0].mxu0
  %v946 = vadd.f32 %v730, %v945
  %v947 = vpop.f32.mrb[0].mxu0
  %948 = vmatprep.mubr.bf16.mxu0 0
  %949 = vmatmul.mubr.bf16.gmra.mrb[0].mxu0 %v799
  %v950 = vpop.f32.mrb[0].mxu0
  %v951 = vadd.f32 %v730, %v950
  %v952 = vpop.f32.mrb[0].mxu0
  %v953 = vpop.f32.mrb[0].mxu0
  %v954 = vadd.f32 %v730, %v953
  %v955 = vpop.f32.mrb[0].mxu0
  %956 = vmatprep.mubr.bf16.mxu0 0
  %957 = vmatmul.mubr.bf16.gmra.mrb[0].mxu0 %v802
  %v958 = vpop.f32.mrb[0].mxu0
  %v959 = vadd.f32 %v730, %v958
  %v960 = vpop.f32.mrb[0].mxu0
  %v961 = vpop.f32.mrb[0].mxu0
  %v962 = vadd.f32 %v730, %v961
  %v963 = vpop.f32.mrb[0].mxu0
  %964 = vdwg.mxu0
  %965 = vst [vmem:[%s7] sm:$0xff] %v839
  %966 = vst [vmem:[%s7 + $0x8] sm:$0xff] %v842
  %967 = vst [vmem:[%s7 + $0x10] sm:$0xff] %v847
  %968 = vst [vmem:[%s7 + $0x18] sm:$0xff] %v850
  %969 = vst [vmem:[%s7 + $0x20] sm:$0xff] %v855
  %970 = vst [vmem:[%s7 + $0x28] sm:$0xff] %v858
  %971 = vst [vmem:[%s7 + $0x30] sm:$0xff] %v863
  %972 = vst [vmem:[%s7 + $0x38] sm:$0xff] %v866
  %973 = vst [vmem:[%s7 + $0x40] sm:$0xff] %v871
  %974 = vst [vmem:[%s7 + $0x48] sm:$0xff] %v874
  %975 = vst [vmem:[%s7 + $0x50] sm:$0xff] %v879
  %976 = vst [vmem:[%s7 + $0x58] sm:$0xff] %v882
  %977 = vst [vmem:[%s7 + $0x60] sm:$0xff] %v887
  %978 = vst [vmem:[%s7 + $0x68] sm:$0xff] %v890
  %979 = vst [vmem:[%s7 + $0x70] sm:$0xff] %v895
  %980 = vst [vmem:[%s7 + $0x78] sm:$0xff] %v898
  %981 = vst [vmem:[%s7 + $0x80] sm:$0xff] %v903
  %982 = vst [vmem:[%s7 + $0x88] sm:$0xff] %v906
  %983 = vst [vmem:[%s7 + $0x90] sm:$0xff] %v911
  %984 = vst [vmem:[%s7 + $0x98] sm:$0xff] %v914
  %985 = vst [vmem:[%s7 + $0xa0] sm:$0xff] %v919
  %986 = vst [vmem:[%s7 + $0xa8] sm:$0xff] %v922
  %987 = vst [vmem:[%s7 + $0xb0] sm:$0xff] %v927
  %988 = vst [vmem:[%s7 + $0xb8] sm:$0xff] %v930
  %989 = vst [vmem:[%s7 + $0xc0] sm:$0xff] %v935
  %990 = vst [vmem:[%s7 + $0xc8] sm:$0xff] %v938
  %991 = vst [vmem:[%s7 + $0xd0] sm:$0xff] %v943
  %992 = vst [vmem:[%s7 + $0xd8] sm:$0xff] %v946
  %993 = vst [vmem:[%s7 + $0xe0] sm:$0xff] %v951
  %994 = vst [vmem:[%s7 + $0xe8] sm:$0xff] %v954
  %995 = vst [vmem:[%s7 + $0xf0] sm:$0xff] %v959
  %996 = vst [vmem:[%s7 + $0xf8] sm:$0xff] %v962
  // Predicated region
  $region30: #{neural_module_forward.1} parent=0 // pred_check
    _
  $region31: #{neural_module_forward.1} parent=0 // pred_check_branch
    %998 = sbr.rel (0) target = $region33
  $region32: #{neural_module_forward.1} parent=0 // pred_region
    _
  $region33: #{neural_module_forward.1} parent=0 // pred_fallthru
    _
  // Predicated region
  $region34: #{neural_module_forward.1} parent=0 // pred_check
    _
  $region35: #{neural_module_forward.1} parent=0 // pred_check_branch
    %1000 = sbr.rel (0) target = $region37
  $region36: #{neural_module_forward.1} parent=0 // pred_region
    _
  $region37: #{neural_module_forward.1} parent=0 // pred_fallthru
    _

</llo_original>
